<compile_context>
chip_gen: v5e
topology: v5e:2x2
jax: 0.10.0
libtpu: 0.0.40
codegen_flags: <defaults>
</compile_context>

<pallas_src>
import math
import numpy as np
import jax
import jax.numpy as jnp
from jax.experimental import pallas as pl
from jax.experimental.pallas import tpu as pltpu


# --------------------------------------------------------------------------
# Predefined (polynomial_2) noise schedule, matching PredefinedNoiseSchedule.
# (noise_schedule='learned' would need the external GammaNetwork; the
#  'polynomial_2' predefined schedule is used instead.)
# --------------------------------------------------------------------------
def _clip_noise_schedule(alphas2, clip_value=0.001):
    alphas2 = np.concatenate([np.ones(1), alphas2], axis=0)
    alphas_step = alphas2[1:] / alphas2[:-1]
    alphas_step = np.clip(alphas_step, a_min=clip_value, a_max=1.0)
    return np.cumprod(alphas_step, axis=0)


def polynomial_gamma_table(timesteps, precision=1e-4, power=2.0):
    steps = timesteps + 1
    x = np.linspace(0, steps, steps)
    alphas2 = (1.0 - (x / steps) ** power) ** 2
    alphas2 = _clip_noise_schedule(alphas2, clip_value=0.001)
    p = 1.0 - 2.0 * precision
    alphas2 = p * alphas2 + precision
    sigmas2 = 1.0 - alphas2
    gamma = -(np.log(alphas2) - np.log(sigmas2))
    return jnp.asarray(gamma, dtype=jnp.float32)  # shape (T+1,)


def _round_up(x, m):
    return (x + m - 1) // m * m


# --------------------------------------------------------------------------
# Pallas kernel (lane-dense, transposed layout: rows R on the lane axis).
#   inputs : xh^T (D,TR) | eps^T (D,TR) | cx,ce,rg,t (1,TR) | W1a^T,b1,W2^T,b2
#   outputs: z_h^T (nf,TR) | eps_hat^T (D,TR)
# --------------------------------------------------------------------------
def edm_core_kernel(xh_ref, eps_ref, cx_ref, ce_ref, rg_ref, t_ref,
                    w1a_ref, b1_ref, w2t_ref, b2_ref,
                    zh_ref, eh_ref, zk_scr):
    D = xh_ref.shape[0]
    nf = zh_ref.shape[0]                 # in_node_nf (h columns of z)
    TR = xh_ref.shape[1]

    # Diffusion forward noising merged with scaffold/rgroup masks (f32 VPU):
    #   z = xh*scaf + (alpha*xh + sigma*eps)*rgo = xh*cx + eps*ce
    z = xh_ref[...] * cx_ref[...] + eps_ref[...] * ce_ref[...]      # (D, TR)

    # Pack [z ; t ; 0-pad] as the K1-row MXU operand — the t conditioning
    # rides in the (MXU-padded-anyway) contraction dimension.
    zk_scr[0:D, :] = z
    row = jax.lax.broadcasted_iota(jnp.int32, (zk_scr.shape[0] - D, TR), 0)
    zk_scr[D:, :] = jnp.where(row == 0, t_ref[...], 0.0)

    # TODO(synk): the real Dynamics (EGNN) is an external module; synthesized
    # here as a per-node 2-layer MLP conditioned on t (edge_mask/context unused).
    h1 = jnp.tanh(
        jnp.dot(w1a_ref[...], zk_scr[...].astype(jnp.bfloat16),
                preferred_element_type=jnp.float32) + b1_ref[...])   # (H, TR) f32
    eps_hat = (jnp.dot(w2t_ref[...], h1.astype(jnp.bfloat16),
                       preferred_element_type=jnp.float32)
               + b2_ref[...]) * rg_ref[...]                          # (D, TR) f32

    # Lane-dense outputs; only the h-columns of z are consumed downstream.
    zh_ref[...] = z[D - nf:, :]
    eh_ref[...] = eps_hat


def edm_core(xh, eps, alpha, sigma, t, scaf_ori, rgo_ori, rg,
             W1, wt, b1, W2, b2, *, n_dims, row_tile=1024):
    """Pallas hot path: returns (z_h (Bn,N,nf), eps_hat (Bn,N,D))."""
    Bn, N, D = xh.shape
    H = W1.shape[1]
    nf = D - n_dims
    R = Bn * N

    # Row tile: lane-multiple, capped; R padded up to a tile multiple.
    TR = min(_round_up(row_tile, 128), _round_up(R, 128))
    R_pad = _round_up(R, TR)
    num_tiles = R_pad // TR

    # ---- lane-dense operand layout (rows on the lane axis) ---------------
    def per_row(v):                               # (Bn,1[,1]) -> (R,)
        v = jnp.reshape(v, (Bn,)).astype(jnp.float32)
        return jnp.broadcast_to(v[:, None], (Bn, N)).reshape(R)

    def row_mask(m):                              # (Bn,N,1) -> (R,)
        return jnp.reshape(m, (R,)).astype(jnp.float32)

    def as_row(v):                                # (R,) -> (1, R_pad)
        return jnp.pad(v, (0, R_pad - R)).reshape(1, R_pad)

    def as_cols(a):                               # (Bn,N,D) -> (D, R_pad)
        a = jnp.reshape(a, (R, D)).astype(jnp.float32).T
        return jnp.pad(a, ((0, 0), (0, R_pad - R)))

    scaf_r, rgo_r, rg_r = row_mask(scaf_ori), row_mask(rgo_ori), row_mask(rg)
    cx = as_row(scaf_r + per_row(alpha) * rgo_r)      # z = xh*cx + eps*ce
    ce = as_row(per_row(sigma) * rgo_r)
    rg2 = as_row(rg_r)
    t2 = as_row(per_row(t))
    xh_T = as_cols(xh)
    eps_T = as_cols(eps)

    # ---- weights: wt folded into W1's K dim, shipped as bf16, transposed --
    K1 = _round_up(D + 1, 8)
    W1a = jnp.concatenate(
        [W1.astype(jnp.float32), wt.reshape(1, H).astype(jnp.float32),
         jnp.zeros((K1 - D - 1, H), jnp.float32)], axis=0)            # (K1, H)
    w1a_t = W1a.T.astype(jnp.bfloat16)                                # (H, K1)
    w2_t = W2.T.astype(jnp.bfloat16)                                  # (D, H)
    b1_c = b1.reshape(H, 1).astype(jnp.float32)
    b2_c = b2.reshape(D, 1).astype(jnp.float32)

    def row_spec(r):
        return pl.BlockSpec((r, TR), lambda i: (0, i))

    def full_spec(s):
        return pl.BlockSpec(s, lambda i: (0, 0))     # resident across grid

    flops = 2 * R_pad * H * (K1 + D)
    bytes_acc = (4 * R_pad * (2 * D + 4)             # f32 inputs
                 + 2 * H * (K1 + D) + 4 * (H + D)    # bf16 weights, f32 biases
                 + 4 * R_pad * (D + nf))             # f32 outputs

    zh_T, eh_T = pl.pallas_call(
        edm_core_kernel,
        out_shape=(jax.ShapeDtypeStruct((nf, R_pad), jnp.float32),
                   jax.ShapeDtypeStruct((D, R_pad), jnp.float32)),
        grid_spec=pltpu.PrefetchScalarGridSpec(
            num_scalar_prefetch=0,
            grid=(num_tiles,),
            in_specs=[row_spec(D), row_spec(D),                       # xh^T, eps^T
                      row_spec(1), row_spec(1), row_spec(1), row_spec(1),  # cx,ce,rg,t
                      full_spec((H, K1)), full_spec((H, 1)),          # W1a^T, b1
                      full_spec((D, H)), full_spec((D, 1))],          # W2^T,  b2
            out_specs=[row_spec(nf), row_spec(D)],                    # z_h^T, eps_hat^T
            scratch_shapes=[pltpu.VMEM((K1, TR), jnp.float32)]),
        compiler_params=pltpu.CompilerParams(
            dimension_semantics=("parallel",)),       # v7x: 2 TCs split rows
        cost_estimate=pl.CostEstimate(flops=flops,
                                      transcendentals=R_pad * H,
                                      bytes_accessed=bytes_acc),
    )(xh_T, eps_T, cx, ce, rg2, t2, w1a_t, b1_c, w2_t, b2_c)

    z_h = zh_T[:, :R].T.reshape(Bn, N, nf)
    eps_hat = eh_T[:, :R].T.reshape(Bn, N, D)
    return z_h, eps_hat


# --------------------------------------------------------------------------
# Full EDM.forward (plain-JAX glue around the Pallas hot path).
# --------------------------------------------------------------------------
def sum_except_batch(x):
    return x.reshape(x.shape[0], -1).sum(-1)


def cdf_standard_gaussian(x):
    return 0.5 * (1.0 + jax.scipy.special.erf(x / math.sqrt(2)))


def edm_forward(params, x, h, x_bn, h_bn, node_mask_bn, scaffold_mask_bn,
                scaffold_mask_ori_bn, rgroup_mask, rgroup_mask_bn,
                rgroup_mask_ori_bn, edge_mask, context, center_of_mass_mask,
                batch_new_len, affinity_bn, key):
    gamma_table = params["gamma_table"]
    T = params["T"]
    n_dims = params["n_dims"]
    in_node_nf = params["in_node_nf"]
    norm_values = params["norm_values"]
    norm_biases = params["norm_biases"]

    B, N, _ = x.shape
    Bn = x_bn.shape[0]

    # remove_partial_mean_with_mask
    com_sum = jnp.sum(x_bn * center_of_mass_mask, axis=1, keepdims=True)
    com_cnt = jnp.sum(center_of_mass_mask, axis=1, keepdims=True)
    x_bn = x_bn - (com_sum / com_cnt) * node_mask_bn

    # delta_log_px
    n_nodes_rg = jnp.sum(jnp.squeeze(rgroup_mask, -1), axis=1)
    delta_log_px = (-(n_nodes_rg * n_dims) * math.log(norm_values[0])).mean()

    # sample t
    k_t, k_zx, k_zh = jax.random.split(key, 3)
    t_int = jax.random.randint(k_t, (B, 1), 0, T + 1).astype(jnp.float32)
    s_int = t_int - 1.0
    t = t_int / T
    s = s_int / T
    t_is_zero = (t_int == 0).astype(jnp.float32).squeeze()
    t_is_not_zero = 1.0 - t_is_zero

    def gamma_of(tt):
        # round(t*T) then wrap -1 -> T (matches PyTorch negative indexing)
        idx = jnp.mod(jnp.round(tt * T).astype(jnp.int32), T + 1)
        return gamma_table[idx]                       # (B, 1)

    gamma_t = gamma_of(t)[:, :, None]                 # (B,1,1)
    gamma_s = gamma_of(s)[:, :, None]
    alpha_t = jnp.sqrt(jax.nn.sigmoid(-gamma_t))
    sigma_t = jnp.sqrt(jax.nn.sigmoid(gamma_t))

    # combined position/feature noise, masked by rgroup_mask
    z_x = jax.random.normal(k_zx, (B, N, n_dims)) * rgroup_mask
    z_h = jax.random.normal(k_zh, (B, N, in_node_nf)) * rgroup_mask
    eps_t = jnp.concatenate([z_x, z_h], axis=2)

    rep = lambda a: jnp.repeat(a, batch_new_len, axis=0, total_repeat_length=Bn)
    eps_bn = rep(eps_t)
    alpha_bn = rep(alpha_t)
    sigma_bn = rep(sigma_t)
    t_bn = rep(t)
    gamma_t_bn = rep(gamma_t)
    gamma_s_bn = rep(gamma_s)
    t_is_zero_bn = rep(t_is_zero)
    t_is_not_zero_bn = rep(t_is_not_zero)

    # normalize
    x_bn = x_bn / norm_values[0]
    h_bn = (h_bn.astype(jnp.float32) - norm_biases[1]) / norm_values[1]
    xh_bn = jnp.concatenate([x_bn, h_bn], axis=2)

    # ----------------- Pallas hot path (row-tiled, lane-dense) --------------
    z_h_part, eps_hat = edm_core(
        xh_bn, eps_bn, alpha_bn, sigma_bn, t_bn,
        scaffold_mask_ori_bn, rgroup_mask_ori_bn, rgroup_mask_bn,
        params["W1"], params["wt"], params["b1"], params["W2"], params["b2"],
        n_dims=n_dims)
    # -------------------------------------------------------------------------

    eps_bn_masked = eps_bn * rgroup_mask_bn
    diff = eps_bn_masked - eps_hat
    error_t = jnp.sum(diff * diff, axis=(1, 2))                  # (Bn,)
    noise = jnp.sqrt(jnp.sum(eps_hat * eps_hat, axis=(1, 2)))    # (Bn,)

    n_nodes_bn = jnp.sum(jnp.squeeze(rgroup_mask_bn, -1), axis=1)
    normalization = (n_dims + in_node_nf) * n_nodes_bn
    l2_loss = (error_t / normalization).mean()

    # kl_prior (unmasked node sums — matches the PyTorch reference exactly)
    gamma_T = jnp.full((Bn, 1), gamma_table[T])
    alpha_T = jnp.sqrt(jax.nn.sigmoid(-gamma_T))[:, :, None]
    mu_T = alpha_T * xh_bn
    mu_T_x, mu_T_h = mu_T[:, :, :n_dims], mu_T[:, :, n_dims:]
    sigma_T_x = jnp.sqrt(jax.nn.sigmoid(gamma_T)).reshape(-1)
    sigma_T_h = jnp.sqrt(jax.nn.sigmoid(gamma_T))[:, :, None]
    kl_h = sum_except_batch(jnp.log(1.0 / sigma_T_h)
                            + 0.5 * (sigma_T_h ** 2 + mu_T_h ** 2) - 0.5)
    d = n_nodes_bn * n_dims
    mu_norm2 = sum_except_batch(mu_T_x ** 2)
    kl_x = d * jnp.log(1.0 / sigma_T_x) + 0.5 * (d * sigma_T_x ** 2 + mu_norm2) - 0.5 * d
    kl_prior = (kl_x + kl_h).mean()

    # loss_term_t
    SNR_weight = (jnp.exp(-(gamma_s_bn - gamma_t_bn)) - 1.0).squeeze((1, 2))
    loss_term_t = T * 0.5 * SNR_weight * error_t
    nz_sum = t_is_not_zero_bn.sum()
    loss_term_t = (loss_term_t * t_is_not_zero_bn).sum() / nz_sum
    noise_t = (noise * t_is_not_zero_bn).sum() / nz_sum

    # loss_term_0 (PyTorch has a data-dependent `if`; replicated with jnp.where)
    gamma_0 = jnp.full((Bn,), gamma_table[0])
    neg_log_constants = -(d * (-0.5 * gamma_0 - 0.5 * math.log(2 * math.pi)))

    eps_x = eps_bn_masked[:, :, :n_dims]
    eps_hat_x = eps_hat[:, :, :n_dims]
    # NOTE: uses gamma_t_bn (as the PyTorch code passes gamma_t_batch_new);
    # only rows with t==0 survive the t_is_zero mask so the value matches.
    sigma_0 = jnp.sqrt(jax.nn.sigmoid(gamma_t_bn)) * norm_values[1]   # (Bn,1,1)
    log_p_x = -0.5 * sum_except_batch((eps_x - eps_hat_x) ** 2)
    h_un = h_bn * norm_values[1] + norm_biases[1]
    estimated_h = z_h_part * norm_values[1] + norm_biases[1]
    centered_h = estimated_h - 1.0
    log_p_h_prop = jnp.log(cdf_standard_gaussian((centered_h + 0.5) / sigma_0)
                           - cdf_standard_gaussian((centered_h - 0.5) / sigma_0)
                           + 1e-10)
    log_Z = jax.scipy.special.logsumexp(log_p_h_prop, axis=2, keepdims=True)
    log_probabilities = log_p_h_prop - log_Z
    log_p_h = sum_except_batch(log_probabilities * h_un * rgroup_mask_bn)
    loss0_raw = -(log_p_x + log_p_h) + neg_log_constants

    z_sum = t_is_zero_bn.sum()
    safe_z = jnp.maximum(z_sum, 1.0)
    loss_term_0 = jnp.where(z_sum > 0, (loss0_raw * t_is_zero_bn).sum() / safe_z, 0.0)
    noise_0 = jnp.where(z_sum > 0, (noise * t_is_zero_bn).sum() / safe_z, 0.0)

    return delta_log_px, kl_prior, loss_term_t, loss_term_0, l2_loss, noise_t, noise_0


# --------------------------------------------------------------------------
# Test driver
# --------------------------------------------------------------------------
if __name__ == "__main__":
    B, N = 2, 8
    n_dims, in_node_nf = 3, 5
    D = n_dims + in_node_nf
    H = 32
    T = 1000
    batch_new_len = np.array([2, 2], dtype=np.int32)
    Bn = int(batch_new_len.sum())

    key = jax.random.PRNGKey(0)
    keys = jax.random.split(key, 12)

    # deterministic synthetic dynamics weights
    params = {
        "gamma_table": polynomial_gamma_table(T, precision=1e-4),
        "T": T,
        "n_dims": n_dims,
        "in_node_nf": in_node_nf,
        "norm_values": (1.0, 1.0, 1.0),
        "norm_biases": (None, 0.0, 0.0),
        "W1": 0.1 * jax.random.normal(keys[0], (D, H), dtype=jnp.float32),
        "wt": 0.1 * jax.random.normal(keys[1], (1, H), dtype=jnp.float32),
        "b1": jnp.zeros((1, H), dtype=jnp.float32),
        "W2": 0.1 * jax.random.normal(keys[2], (H, D), dtype=jnp.float32),
        "b2": jnp.zeros((1, D), dtype=jnp.float32),
    }

    # inputs
    x = jax.random.normal(keys[3], (B, N, n_dims), dtype=jnp.float32)
    h = jax.random.normal(keys[4], (B, N, in_node_nf), dtype=jnp.float32)
    x_bn = jax.random.normal(keys[5], (Bn, N, n_dims), dtype=jnp.float32)
    h_bn = jax.random.normal(keys[6], (Bn, N, in_node_nf), dtype=jnp.float32)

    # masks: nodes 0..4 scaffold, 5..7 rgroup
    scaffold_vec = jnp.array([1, 1, 1, 1, 1, 0, 0, 0], dtype=jnp.float32)[None, :, None]
    rgroup_vec = 1.0 - scaffold_vec
    node_mask_bn = jnp.ones((Bn, N, 1), dtype=jnp.float32)
    scaffold_mask_bn = jnp.tile(scaffold_vec, (Bn, 1, 1))
    scaffold_mask_ori_bn = scaffold_mask_bn
    rgroup_mask = jnp.tile(rgroup_vec, (B, 1, 1))
    rgroup_mask_bn = jnp.tile(rgroup_vec, (Bn, 1, 1))
    rgroup_mask_ori_bn = rgroup_mask_bn
    center_of_mass_mask = scaffold_mask_bn
    edge_mask = jnp.ones((Bn * N * N, 1), dtype=jnp.float32)      # unused by synthetic dynamics
    context = jnp.zeros((Bn, N, 1), dtype=jnp.float32)            # unused by synthetic dynamics
    affinity_bn = jnp.zeros((Bn, 1), dtype=jnp.float32)           # unused by synthetic dynamics

    out = edm_forward(params, x, h, x_bn, h_bn, node_mask_bn, scaffold_mask_bn,
                      scaffold_mask_ori_bn, rgroup_mask, rgroup_mask_bn,
                      rgroup_mask_ori_bn, edge_mask, context, center_of_mass_mask,
                      batch_new_len, affinity_bn, keys[7])
    out = jax.block_until_ready(out)
    assert all(bool(jnp.isfinite(o)) for o in out)
    print("KERNEL_OK")
</pallas_src>

<mosaic_0001>
module attributes {stable_mosaic.version = 11 : i64} {
  func.func @edm_core_kernel(%arg0: i32, %arg1: memref<8x128xf32, #tpu.memory_space<vmem>>, %arg2: memref<8x128xf32, #tpu.memory_space<vmem>>, %arg3: memref<1x128xf32, #tpu.memory_space<vmem>>, %arg4: memref<1x128xf32, #tpu.memory_space<vmem>>, %arg5: memref<1x128xf32, #tpu.memory_space<vmem>>, %arg6: memref<1x128xf32, #tpu.memory_space<vmem>>, %arg7: memref<32x16xbf16, #tpu.memory_space<vmem>>, %arg8: memref<32x1xf32, #tpu.memory_space<vmem>>, %arg9: memref<8x32xbf16, #tpu.memory_space<vmem>>, %arg10: memref<8x1xf32, #tpu.memory_space<vmem>>, %arg11: memref<5x128xf32, #tpu.memory_space<vmem>>, %arg12: memref<8x128xf32, #tpu.memory_space<vmem>>, %arg13: memref<16x128xf32, #tpu.memory_space<vmem>>) attributes {dimension_semantics = [#tpu.dimension_semantics<parallel>], iteration_bounds = array<i64: 1>, scalar_prefetch = 0 : i64, scratch_operands = 1 : i64, tpu.core_type = #tpu.core_type<tc>, window_params = [{transform_indices = @transform_0, window_bounds = array<i64: 8, 128>}, {transform_indices = @transform_1, window_bounds = array<i64: 8, 128>}, {transform_indices = @transform_2, window_bounds = array<i64: 1, 128>}, {transform_indices = @transform_3, window_bounds = array<i64: 1, 128>}, {transform_indices = @transform_4, window_bounds = array<i64: 1, 128>}, {transform_indices = @transform_5, window_bounds = array<i64: 1, 128>}, {pipeline_mode = #tpu.pipeline_mode<synchronous>, transform_indices = @transform_6, window_bounds = array<i64: 32, 16>}, {pipeline_mode = #tpu.pipeline_mode<synchronous>, transform_indices = @transform_7, window_bounds = array<i64: 32, 1>}, {pipeline_mode = #tpu.pipeline_mode<synchronous>, transform_indices = @transform_8, window_bounds = array<i64: 8, 32>}, {pipeline_mode = #tpu.pipeline_mode<synchronous>, transform_indices = @transform_9, window_bounds = array<i64: 8, 1>}, {transform_indices = @transform_10, window_bounds = array<i64: 5, 128>}, {transform_indices = @transform_11, window_bounds = array<i64: 8, 128>}]} {
    %c0 = arith.constant 0 : index
    %c0_0 = arith.constant 0 : index
    %0 = vector.load %arg1[%c0, %c0_0] : memref<8x128xf32, #tpu.memory_space<vmem>>, vector<8x128xf32>
    %c0_1 = arith.constant 0 : index
    %c0_2 = arith.constant 0 : index
    %1 = vector.load %arg3[%c0_1, %c0_2] : memref<1x128xf32, #tpu.memory_space<vmem>>, vector<1x128xf32>
    %2 = vector.broadcast %1 : vector<1x128xf32> to vector<8x128xf32>
    %3 = arith.mulf %0, %2 : vector<8x128xf32>
    %c0_3 = arith.constant 0 : index
    %c0_4 = arith.constant 0 : index
    %4 = vector.load %arg2[%c0_3, %c0_4] : memref<8x128xf32, #tpu.memory_space<vmem>>, vector<8x128xf32>
    %c0_5 = arith.constant 0 : index
    %c0_6 = arith.constant 0 : index
    %5 = vector.load %arg4[%c0_5, %c0_6] : memref<1x128xf32, #tpu.memory_space<vmem>>, vector<1x128xf32>
    %6 = vector.broadcast %5 : vector<1x128xf32> to vector<8x128xf32>
    %7 = arith.mulf %4, %6 : vector<8x128xf32>
    %8 = arith.addf %3, %7 : vector<8x128xf32>
    %c0_7 = arith.constant 0 : index
    %c0_8 = arith.constant 0 : index
    %9 = vector.load %arg13[%c0_7, %c0_8] : memref<16x128xf32, #tpu.memory_space<vmem>>, vector<8x128xf32>
    tpu.vector_store %arg13[%c0_7, %c0_8], %8 {strides = array<i32>} : memref<16x128xf32, #tpu.memory_space<vmem>>, vector<8x128xf32>,
    %10 = tpu.iota {dimensions = array<i32: 0>} : vector<8x128xi32>
    %c0_i32 = arith.constant 0 : i32
    %11 = vector.broadcast %c0_i32 : i32 to vector<8x128xi32>
    %12 = arith.cmpi eq, %10, %11 : vector<8x128xi32>
    %c0_9 = arith.constant 0 : index
    %c0_10 = arith.constant 0 : index
    %13 = vector.load %arg6[%c0_9, %c0_10] : memref<1x128xf32, #tpu.memory_space<vmem>>, vector<1x128xf32>
    %cst = arith.constant 0.000000e+00 : f32
    %14 = vector.shape_cast %13 : vector<1x128xf32> to vector<1x128xf32>
    %15 = vector.broadcast %14 : vector<1x128xf32> to vector<8x128xf32>
    %16 = vector.broadcast %cst : f32 to vector<8x128xf32>
    %17 = arith.select %12, %15, %16 : vector<8x128xi1>, vector<8x128xf32>
    %c8 = arith.constant 8 : index
    %c0_11 = arith.constant 0 : index
    %18 = vector.load %arg13[%c8, %c0_11] : memref<16x128xf32, #tpu.memory_space<vmem>>, vector<8x128xf32>
    tpu.vector_store %arg13[%c8, %c0_11], %17 {strides = array<i32>} : memref<16x128xf32, #tpu.memory_space<vmem>>, vector<8x128xf32>,
    %c0_12 = arith.constant 0 : index
    %c0_13 = arith.constant 0 : index
    %19 = vector.load %arg7[%c0_12, %c0_13] : memref<32x16xbf16, #tpu.memory_space<vmem>>, vector<32x16xbf16>
    %c0_14 = arith.constant 0 : index
    %c0_15 = arith.constant 0 : index
    %20 = vector.load %arg13[%c0_14, %c0_15] : memref<16x128xf32, #tpu.memory_space<vmem>>, vector<16x128xf32>
    %21 = arith.truncf %20 : vector<16x128xf32> to vector<16x128xbf16>
    %cst_16 = arith.constant dense<0.000000e+00> : vector<32x128xf32>
    %22 = tpu.matmul %19, %21, %cst_16 {dimension_numbers = #tpu.dot_dimension_numbers<[1], [0], [0], [1], [0, 0, 1, 1], [], []>} : vector<32x16xbf16>, vector<16x128xbf16>, vector<32x128xf32> -> vector<32x128xf32>
    %c0_17 = arith.constant 0 : index
    %c0_18 = arith.constant 0 : index
    %23 = vector.load %arg8[%c0_17, %c0_18] : memref<32x1xf32, #tpu.memory_space<vmem>>, vector<32x1xf32>
    %24 = vector.broadcast %23 : vector<32x1xf32> to vector<32x128xf32>
    %25 = arith.addf %22, %24 : vector<32x128xf32>
    %26 = math.tanh %25 : vector<32x128xf32>
    %c0_19 = arith.constant 0 : index
    %c0_20 = arith.constant 0 : index
    %27 = vector.load %arg9[%c0_19, %c0_20] : memref<8x32xbf16, #tpu.memory_space<vmem>>, vector<8x32xbf16>
    %28 = arith.truncf %26 : vector<32x128xf32> to vector<32x128xbf16>
    %cst_21 = arith.constant dense<0.000000e+00> : vector<8x128xf32>
    %29 = tpu.matmul %27, %28, %cst_21 {dimension_numbers = #tpu.dot_dimension_numbers<[1], [0], [0], [1], [0, 0, 1, 1], [], []>} : vector<8x32xbf16>, vector<32x128xbf16>, vector<8x128xf32> -> vector<8x128xf32>
    %c0_22 = arith.constant 0 : index
    %c0_23 = arith.constant 0 : index
    %30 = vector.load %arg10[%c0_22, %c0_23] : memref<8x1xf32, #tpu.memory_space<vmem>>, vector<8x1xf32>
    %31 = vector.broadcast %30 : vector<8x1xf32> to vector<8x128xf32>
    %32 = arith.addf %29, %31 : vector<8x128xf32>
    %c0_24 = arith.constant 0 : index
    %c0_25 = arith.constant 0 : index
    %33 = vector.load %arg5[%c0_24, %c0_25] : memref<1x128xf32, #tpu.memory_space<vmem>>, vector<1x128xf32>
    %34 = vector.broadcast %33 : vector<1x128xf32> to vector<8x128xf32>
    %35 = arith.mulf %32, %34 : vector<8x128xf32>
    %36 = vector.extract_strided_slice %8 {offsets = [3, 0], sizes = [5, 128], strides = [1, 1]} : vector<8x128xf32> to vector<5x128xf32>
    %c0_26 = arith.constant 0 : index
    %c0_27 = arith.constant 0 : index
    %37 = vector.load %arg11[%c0_26, %c0_27] : memref<5x128xf32, #tpu.memory_space<vmem>>, vector<5x128xf32>
    tpu.vector_store %arg11[%c0_26, %c0_27], %36 {strides = array<i32>} : memref<5x128xf32, #tpu.memory_space<vmem>>, vector<5x128xf32>,
    %c0_28 = arith.constant 0 : index
    %c0_29 = arith.constant 0 : index
    %38 = vector.load %arg12[%c0_28, %c0_29] : memref<8x128xf32, #tpu.memory_space<vmem>>, vector<8x128xf32>
    tpu.vector_store %arg12[%c0_28, %c0_29], %35 {strides = array<i32>} : memref<8x128xf32, #tpu.memory_space<vmem>>, vector<8x128xf32>,
    return
  }
  func.func @transform_0(%arg0: i32) -> (i32, i32) {
    %c0_i32 = arith.constant 0 : i32
    %c0_i32_0 = arith.constant 0 : i32
    return %c0_i32, %arg0 : i32, i32
  }
  func.func @transform_1(%arg0: i32) -> (i32, i32) {
    %c0_i32 = arith.constant 0 : i32
    %c0_i32_0 = arith.constant 0 : i32
    return %c0_i32, %arg0 : i32, i32
  }
  func.func @transform_2(%arg0: i32) -> (i32, i32) {
    %c0_i32 = arith.constant 0 : i32
    %c0_i32_0 = arith.constant 0 : i32
    return %c0_i32, %arg0 : i32, i32
  }
  func.func @transform_3(%arg0: i32) -> (i32, i32) {
    %c0_i32 = arith.constant 0 : i32
    %c0_i32_0 = arith.constant 0 : i32
    return %c0_i32, %arg0 : i32, i32
  }
  func.func @transform_4(%arg0: i32) -> (i32, i32) {
    %c0_i32 = arith.constant 0 : i32
    %c0_i32_0 = arith.constant 0 : i32
    return %c0_i32, %arg0 : i32, i32
  }
  func.func @transform_5(%arg0: i32) -> (i32, i32) {
    %c0_i32 = arith.constant 0 : i32
    %c0_i32_0 = arith.constant 0 : i32
    return %c0_i32, %arg0 : i32, i32
  }
  func.func @transform_6(%arg0: i32) -> (i32, i32) {
    %c0_i32 = arith.constant 0 : i32
    %c0_i32_0 = arith.constant 0 : i32
    %c0_i32_1 = arith.constant 0 : i32
    return %c0_i32, %c0_i32_0 : i32, i32
  }
  func.func @transform_7(%arg0: i32) -> (i32, i32) {
    %c0_i32 = arith.constant 0 : i32
    %c0_i32_0 = arith.constant 0 : i32
    %c0_i32_1 = arith.constant 0 : i32
    return %c0_i32, %c0_i32_0 : i32, i32
  }
  func.func @transform_8(%arg0: i32) -> (i32, i32) {
    %c0_i32 = arith.constant 0 : i32
    %c0_i32_0 = arith.constant 0 : i32
    %c0_i32_1 = arith.constant 0 : i32
    return %c0_i32, %c0_i32_0 : i32, i32
  }
  func.func @transform_9(%arg0: i32) -> (i32, i32) {
    %c0_i32 = arith.constant 0 : i32
    %c0_i32_0 = arith.constant 0 : i32
    %c0_i32_1 = arith.constant 0 : i32
    return %c0_i32, %c0_i32_0 : i32, i32
  }
  func.func @transform_10(%arg0: i32) -> (i32, i32) {
    %c0_i32 = arith.constant 0 : i32
    %c0_i32_0 = arith.constant 0 : i32
    return %c0_i32, %arg0 : i32, i32
  }
  func.func @transform_11(%arg0: i32) -> (i32, i32) {
    %c0_i32 = arith.constant 0 : i32
    %c0_i32_0 = arith.constant 0 : i32
    return %c0_i32, %arg0 : i32, i32
  }
}

</mosaic_0001>

<llo_original>
// kernel: tpu_custom_call.1
$region0: #{tpu_custom_call.1}
  #allocation0 [shape = 'u32[]', space=smem, size = 0x4, offset = 0x4, fixed_abs, tag = 'smem constant byte address 0x4 - core index']
  #allocation1 [shape = 'u32[72,128]{1,0:T(1,128)}', space=vmem, size = 0x9000, scoped, tag = 'internal scratch']
  #allocation2 [shape = 'f32[16,128]{1,0:T(8,128)}', space=vmem, size = 0x2000, scoped, tag = 'scratch operand']
  %s0 = inlined_call_operand.vmem [shape: f32[8,128], index: 0, kind: input, shape index: {}]
  %s1 = inlined_call_operand.vmem [shape: f32[8,128], index: 1, kind: input, shape index: {}]
  %s2 = inlined_call_operand.vmem [shape: f32[1,128], index: 2, kind: input, shape index: {}]
  %s3 = inlined_call_operand.vmem [shape: f32[1,128], index: 3, kind: input, shape index: {}]
  %s4 = inlined_call_operand.vmem [shape: f32[1,128], index: 4, kind: input, shape index: {}]
  %s5 = inlined_call_operand.vmem [shape: f32[1,128], index: 5, kind: input, shape index: {}]
  %s6 = inlined_call_operand.vmem [shape: bf16[32,16], index: 6, kind: input, shape index: {}]
  %s7 = inlined_call_operand.vmem [shape: f32[32,1], index: 7, kind: input, shape index: {}]
  %s8 = inlined_call_operand.vmem [shape: bf16[8,32], index: 8, kind: input, shape index: {}]
  %s9 = inlined_call_operand.vmem [shape: f32[8,1], index: 9, kind: input, shape index: {}]
  %s10 = inlined_call_operand.hbm [shape: f32[5,128], index: 10, kind: output, shape index: {0}]
  %s11 = inlined_call_operand.hbm [shape: f32[8,128], index: 11, kind: output, shape index: {1}]
  %12 = xla_tuple %s10, %s11
  %s13 = sld [smem:[#allocation0]]
  $region58: #{tpu_custom_call.1} parent=0
    _
  %s15 = ssub.s32 1, %s13
  %s16 = scalar_select 0, %s15, %s13
  $region1: #{tpu_custom_call.1} parent=0
    #allocation3 [shape = 'u8[4096]{0}', space=vmem, size = 0x1000, scoped, tag = 'output window, operand 0, single buffered']
    #allocation4 [shape = 's32[1]{0}', space=sflag, size = 0x4, scoped, tag = 'scoped memory for tpu_custom_call.1']
    #allocation5 [shape = 'u8[4096]{0}', space=vmem, size = 0x1000, scoped, tag = 'output window, operand 1, single buffered']
    #allocation6 [shape = 's32[1]{0}', space=sflag, size = 0x4, scoped, tag = 'scoped memory for tpu_custom_call.1']
    %17 = vsyncpa [#allocation4], 0
    %18 = vsyncpa [#allocation6], 0
    // Predicated region
    $region2: #{tpu_custom_call.1} parent=1 // pred_check
      _
    $region3: #{tpu_custom_call.1} parent=1 // pred_check_branch
      %20 = sbr.rel (0) target = $region5
    $region4: #{tpu_custom_call.1} parent=1 // pred_region
      _
    $region5: #{tpu_custom_call.1} parent=1 // pred_fallthru
      _
    // Predicated region
    $region6: #{tpu_custom_call.1} parent=1 // pred_check
      _
    $region7: #{tpu_custom_call.1} parent=1 // pred_check_branch
      %22 = sbr.rel (0) target = $region9
    $region8: #{tpu_custom_call.1} parent=1 // pred_region
      _
    $region9: #{tpu_custom_call.1} parent=1 // pred_fallthru
      _
    // Predicated region
    $region10: #{tpu_custom_call.1} parent=1 // pred_check
      _
    $region11: #{tpu_custom_call.1} parent=1 // pred_check_branch
      %24 = sbr.rel (0) target = $region13
    $region12: #{tpu_custom_call.1} parent=1 // pred_region
      _
    $region13: #{tpu_custom_call.1} parent=1 // pred_fallthru
      _
    // Predicated region
    $region14: #{tpu_custom_call.1} parent=1 // pred_check
      _
    $region15: #{tpu_custom_call.1} parent=1 // pred_check_branch
      %26 = sbr.rel (0) target = $region17
    $region16: #{tpu_custom_call.1} parent=1 // pred_region
      _
    $region17: #{tpu_custom_call.1} parent=1 // pred_fallthru
      _
    // Predicated region
    $region18: #{tpu_custom_call.1} parent=1 // pred_check
      _
    $region19: #{tpu_custom_call.1} parent=1 // pred_check_branch
      %28 = sbr.rel (0) target = $region21
    $region20: #{tpu_custom_call.1} parent=1 // pred_region
      _
    $region21: #{tpu_custom_call.1} parent=1 // pred_fallthru
      _
    // Predicated region
    $region22: #{tpu_custom_call.1} parent=1 // pred_check
      _
    $region23: #{tpu_custom_call.1} parent=1 // pred_check_branch
      %30 = sbr.rel (0) target = $region25
    $region24: #{tpu_custom_call.1} parent=1 // pred_region
      _
    $region25: #{tpu_custom_call.1} parent=1 // pred_fallthru
      _
    // Predicated region
    $region26: #{tpu_custom_call.1} parent=1 // pred_check
      _
    $region27: #{tpu_custom_call.1} parent=1 // pred_check_branch
      %32 = sbr.rel (0) target = $region29
    $region28: #{tpu_custom_call.1} parent=1 // pred_region
      _
    $region29: #{tpu_custom_call.1} parent=1 // pred_fallthru
      _
    // Predicated region
    $region30: #{tpu_custom_call.1} parent=1 // pred_check
      _
    $region31: #{tpu_custom_call.1} parent=1 // pred_check_branch
      %34 = sbr.rel (0) target = $region33
    $region32: #{tpu_custom_call.1} parent=1 // pred_region
      _
    $region33: #{tpu_custom_call.1} parent=1 // pred_fallthru
      _
    // Predicated region
    $region34: #{tpu_custom_call.1} parent=1 // pred_check
      _
    $region35: #{tpu_custom_call.1} parent=1 // pred_check_branch
      %36 = sbr.rel (0) target = $region37
    $region36: #{tpu_custom_call.1} parent=1 // pred_region
      _
    $region37: #{tpu_custom_call.1} parent=1 // pred_fallthru
      _
    // Predicated region
    $region38: #{tpu_custom_call.1} parent=1 // pred_check
      _
    $region39: #{tpu_custom_call.1} parent=1 // pred_check_branch
      %38 = sbr.rel (0) target = $region41
    $region40: #{tpu_custom_call.1} parent=1 // pred_region
      _
    $region41: #{tpu_custom_call.1} parent=1 // pred_fallthru
      _
    %v40 = vld [vmem:[%s0] sm:$0xff]
    %v41 = vld [vmem:[%s2] sm:$0x1]
    %v43 = vperm.slane %v41, 0
    %v45 = vmul.f32 %v40, %v43
    %v46 = vld [vmem:[%s1] sm:$0xff]
    %v47 = vld [vmem:[%s3] sm:$0x1]
    %v49 = vperm.slane %v47, 0
    %v51 = vmul.f32 %v46, %v49
    %v52 = vadd.f32 %v45, %v51
    %53 = vst [vmem:[#allocation2] sm:$0xff] %v52
    %v54 = vlaneseq
    %v55 = vshrl.u32 %v54, 7
    %vm56 = vcmp.eq.s32.totalorder %v55, 0
    %v57 = vld [vmem:[%s5] sm:$0x1]
    %v59 = vperm.slane %v57, 0
    %v61 = vsel %vm56, %v59, 0.0
    %62 = vst [vmem:[#allocation2 + $0x8] sm:$0xff] %v61
    %v63 = vld [vmem:[%s6] sm:$0xf]
    %v64 = vld [vmem:[%s6 + $0x4] sm:$0xf]
    %v65 = vld [vmem:[%s6 + $0x8] sm:$0xf]
    %v66 = vld [vmem:[%s6 + $0xc] sm:$0xf]
    %v67 = vld [vmem:[#allocation2] sm:$0xff]
    %v68 = vld [vmem:[#allocation2 + $0x8] sm:$0xff]
    %v69 = vpack.c.bf16 %v68, %v67
    %v70 = vld [vmem:[%s7] sm:$0xff]
    %v71 = vld [vmem:[%s7 + $0x8] sm:$0xff]
    %v72 = vld [vmem:[%s7 + $0x10] sm:$0xff]
    %v73 = vld [vmem:[%s7 + $0x18] sm:$0xff]
    %75 = vset.pattern.permute.xlu0 0
    %76 = vperm.xlu0 %75, %v70
    %v77 = vpop.permute.xlu0 %76
    %80 = vset.pattern.permute.xlu0 0
    %81 = vperm.xlu0 %80, %v71
    %v82 = vpop.permute.xlu0 %81
    %85 = vset.pattern.permute.xlu0 0
    %86 = vperm.xlu0 %85, %v72
    %v87 = vpop.permute.xlu0 %86
    %90 = vset.pattern.permute.xlu0 0
    %91 = vperm.xlu0 %90, %v73
    %v92 = vpop.permute.xlu0 %91
    %v98 = vunpack.c.l.b16 %v63
    %v99 = vunpack.c.l.b16 %v64
    %v100 = vunpack.c.l.b16 %v65
    %v101 = vunpack.c.l.b16 %v66
    %v102 = vpack.c.b16 %v99, %v98
    %v103 = vpack.c.b16 %v101, %v100
    %vm104 = vcmask 130048
    %v106 = vsel %vm104, %v102, 0
    %v109 = vsel %vm104, %v103, 0
    %111 = vmatpush.bf16.msra.mxu0 0
    %112 = vmatpush.bf16.msra.mxu0 0
    %113 = vmatpush.bf16.msra.mxu0 0
    %114 = vmatpush.bf16.msra.mxu0 0
    %115 = vmatpush.bf16.msra.mxu0 0
    %116 = vmatpush.bf16.msra.mxu0 0
    %117 = vmatpush.bf16.msra.mxu0 0
    %118 = vmatpush.bf16.msra.mxu0 %v69
    %119 = vmatmul.bf16.gmra.mxu0 %v106
    %v120 = vpop.f32.mrf.mxu0
    %v121 = vadd.f32 %v77, %v120
    %v122 = vpop.f32.mrf.mxu0
    %v123 = vadd.f32 %v82, %v122
    %124 = vmatmul.bf16.gmra.mxu0 %v109
    %v125 = vpop.f32.mrf.mxu0
    %v126 = vadd.f32 %v87, %v125
    %v127 = vpop.f32.mrf.mxu0
    %v128 = vadd.f32 %v92, %v127
    %129 = vdwg.mxu0
    %v130 = vtanh.pop %v121
    %v131 = vtanh.pop %v123
    %v132 = vtanh.pop %v126
    %v133 = vtanh.pop %v128
    %v134 = vld [vmem:[%s8] sm:$0xf]
    %v135 = vpack.c.bf16 %v131, %v130
    %v136 = vpack.c.bf16 %v133, %v132
    %v137 = vld [vmem:[%s9] sm:$0xff]
    %139 = vset.pattern.permute.xlu0 0
    %140 = vperm.xlu0 %139, %v137
    %v141 = vpop.permute.xlu0 %140
    %vm143 = vcmask 261120
    %v145 = vsel %vm143, %v134, 0
    %147 = vmatpush.bf16.msra.mxu0 0
    %148 = vmatpush.bf16.msra.mxu0 0
    %149 = vmatpush.bf16.msra.mxu0 0
    %150 = vmatpush.bf16.msra.mxu0 0
    %151 = vmatpush.bf16.msra.mxu0 0
    %152 = vmatpush.bf16.msra.mxu0 0
    %153 = vmatpush.bf16.msra.mxu0 %v136
    %154 = vmatpush.bf16.msra.mxu0 %v135
    %155 = vmatmul.bf16.gmra.mxu0 %v145
    %v156 = vpop.f32.mrf.mxu0
    %v157 = vadd.f32 %v141, %v156
    %v158 = vpop.f32.mrf.mxu0
    %159 = vdwg.mxu0
    %v160 = vld [vmem:[%s4] sm:$0x1]
    %v162 = vperm.slane %v160, 0
    %v164 = vmul.f32 %v157, %v162
    %165 = vst [vmem:[#allocation3 - $0x3] sm:$0xf8] %v52
    %166 = vst [vmem:[#allocation5] sm:$0xff] %v164
    // Predicated region
    $region42: #{tpu_custom_call.1} parent=1 // pred_check
      _
    $region43: #{tpu_custom_call.1} parent=1 // pred_check_branch
      %168 = sbr.rel (0) target = $region45
    $region44: #{tpu_custom_call.1} parent=1 // pred_region
      %170 = vsyncadd [#allocation4], 0
      %s172 = sshll.u32 [#allocation3], 4
      %s173 = int_to_ptr.vmem [resolvable:$true] %s172
      %s174 = sshll.u32 %s10, 4
      %s175 = int_to_ptr.hbm [resolvable:$true] %s174
      %177 = dma.vmem_to_hbm [thread:$0]  %s173, 128, %s175, [#allocation4]
    $region45: #{tpu_custom_call.1} parent=1 // pred_fallthru
      _
    // Predicated region
    $region46: #{tpu_custom_call.1} parent=1 // pred_check
      _
    $region47: #{tpu_custom_call.1} parent=1 // pred_check_branch
      %179 = sbr.rel (0) target = $region49
    $region48: #{tpu_custom_call.1} parent=1 // pred_region
      %181 = vsyncadd [#allocation6], 0
      %s183 = sshll.u32 [#allocation5], 4
      %s184 = int_to_ptr.vmem [resolvable:$true] %s183
      %s185 = sshll.u32 %s11, 4
      %s186 = int_to_ptr.hbm [resolvable:$true] %s185
      %188 = dma.vmem_to_hbm [thread:$0]  %s184, 128, %s186, [#allocation6]
    $region49: #{tpu_custom_call.1} parent=1 // pred_fallthru
      _
    // Predicated region
    $region50: #{tpu_custom_call.1} parent=1 // pred_check
      _
    $region51: #{tpu_custom_call.1} parent=1 // pred_check_branch
      %190 = sbr.rel (0) target = $region53
    $region52: #{tpu_custom_call.1} parent=1 // pred_region
      %192 = dma.done [#allocation4], 128
    $region53: #{tpu_custom_call.1} parent=1 // pred_fallthru
      _
    // Predicated region
    $region54: #{tpu_custom_call.1} parent=1 // pred_check
      _
    $region55: #{tpu_custom_call.1} parent=1 // pred_check_branch
      %194 = sbr.rel (0) target = $region57
    $region56: #{tpu_custom_call.1} parent=1 // pred_region
      %196 = dma.done [#allocation6], 128
    $region57: #{tpu_custom_call.1} parent=1 // pred_fallthru
      _
    %197 = vsyncpa [#allocation4], 1
    %198 = vsyncpa [#allocation6], 1

</llo_original>
